<compile_context>
chip_gen: v7x
topology: tpu7x:2x2x1
jax: 0.10.0
libtpu: 0.0.40
codegen_flags: <defaults>
</compile_context>

<pallas_src>
import numpy as np
import jax
import jax.numpy as jnp
from jax import lax
from jax.experimental import pallas as pl
from jax.experimental.pallas import tpu as pltpu


def _round_up(x, m):
    return (x + m - 1) // m * m


# ----------------------------------------------------------------------------
# Pallas kernel
# ----------------------------------------------------------------------------
def _bce(p, t, w):
    # Binary-target BCE with torch's per-term clamp at -100, written with a
    # SINGLE log:  for t in {0,1},
    #   -w*(t*log(p) + (1-t)*log(1-p)) == -w*max(log(t ? p : 1-p), -100)
    # (the inactive term is multiplied by an exact 0, so this is bit-identical).
    sel = jnp.where(t >= 0.5, p, 1.0 - p)
    return -w * jnp.maximum(jnp.log(sel), -100.0)


def _make_kernel(M, inv_mc):
    def kernel(pack_ref,   # (TB, 3, 2, Lmax) f32: [p, t, w] x [cluster, mention]
               sel_ref,    # (TB, 2M, Q+G)   bf16: block-diag one-hot selector
               rhs_ref,    # (TB, Q+G, Cpad) bf16: [coref_cols ; targets_clusters]
               out_ref):   # (TB, 1, 128)    f32
        # ---- cost_is_cluster + cost_is_mention: one fused single-log BCE pass ----
        pk = pack_ref[...]
        b = _bce(pk[:, 0], pk[:, 1], pk[:, 2])                 # (TB, 2, Lmax)
        cm = jnp.sum(b, axis=-1, keepdims=True)                # (TB, 2, 1)
        c_cluster = cm[:, 0:1, :]                              # (TB, 1, 1)
        c_mention = cm[:, 1:2, :]                              # (TB, 1, 1)

        # ---- cost_coref: single block-diagonal MXU gather of matched rows ----
        rows = jnp.einsum('bmk,bkc->bmc', sel_ref[...], rhs_ref[...],
                          preferred_element_type=jnp.float32)  # (TB, 2M, Cpad)
        row_p = rows[:, :M, :]        # matched prediction rows (bf16-exact probs)
        row_t = rows[:, M:, :]        # matched gold rows (exact 0/1; junk rows = 0)
        b3 = _bce(row_p, row_t, inv_mc)                        # 1/(M*C) pre-folded
        c_coref = jnp.sum(jnp.sum(b3, axis=-1, keepdims=True),
                          axis=1, keepdims=True)               # (TB, 1, 1)

        # lane-dense single store: lanes 0/1/2 = [is_cluster, is_mention, coref]
        TB = out_ref.shape[0]
        lane = lax.broadcasted_iota(jnp.int32, (TB, 1, 128), 2)
        out = jnp.where(lane == 0, c_cluster,
              jnp.where(lane == 1, c_mention,
              jnp.where(lane == 2, c_coref, 0.0)))
        out_ref[...] = out.astype(jnp.float32)

    return kernel


# ----------------------------------------------------------------------------
# Block sizing
# ----------------------------------------------------------------------------
def _vmem_budget_bytes():
    """Per-generation VMEM budget: ~75% of physical (96 MiB on v5e/v6e 128 MiB
    chips, 48 MiB on v7x 64 MiB chips), capped at 100 MiB.  Falls back to the
    v7x-safe 48 MiB if the hardware query is unavailable."""
    phys = 64 * 1024 * 1024
    try:
        info = pltpu.get_tpu_info()
        for name in ("vmem_capacity_bytes", "vmem_size_bytes", "vmem_bytes"):
            val = getattr(info, name, None)
            if val:
                phys = int(val)
                break
    except Exception:
        pass
    return min((phys * 3) // 4, 100 * 1024 * 1024)


def _tile_bytes(shape, itemsize):
    # Sub-32-bit dtypes pack along sublanes: bf16 rounds the sublane dim to 16.
    sub = {4: 8, 2: 16, 1: 32}.get(itemsize, 8)
    lead = 1
    for d in shape[:-2]:
        lead *= int(d)
    return lead * _round_up(int(shape[-2]), sub) * _round_up(int(shape[-1]), 128) * itemsize


def _pick_tb(bs, per_sample_bytes, budget_bytes):
    """Largest batch block that fits the per-chip budget with default
    double-buffering.  No ">=2 grid steps" rule: on single-TC chips (v5e/v6e)
    extra grid steps are pure serial overhead."""
    # TODO(synk): on v7x, shard the batch axis across the 2 TensorCores with
    # pltpu.CORE_PARALLEL / pl.core_map and re-enable a >=2-step split there.
    # TODO(synk): when the grid collapses to <=2 steps, pipeline_mode=pl.Buffered(1)
    # on the large specs would free the 2x buffering factor below.
    cap = max(1, budget_bytes // max(2 * per_sample_bytes, 1))
    return min(bs, cap)


# ----------------------------------------------------------------------------
# pallas_call wrapper
# ----------------------------------------------------------------------------
def matching_loss_parts_pallas(pack, sel, rhs, M, C_orig):
    bs = pack.shape[0]
    Lmax = pack.shape[-1]
    twoM, QG = sel.shape[1], sel.shape[2]
    Cpad = rhs.shape[-1]

    budget = _vmem_budget_bytes()
    per_sample = (_tile_bytes((3, 2, Lmax), 4)
                  + _tile_bytes((twoM, QG), 2)
                  + _tile_bytes((QG, Cpad), 2)
                  + _tile_bytes((1, 128), 4))
    TB = _pick_tb(bs, per_sample, budget)

    # Non-divisor batch sizes: zero-pad (padded samples produce 0 and are sliced off).
    bs_pad = _round_up(bs, TB)
    if bs_pad != bs:
        extra = bs_pad - bs
        pack = jnp.pad(pack, ((0, extra), (0, 0), (0, 0), (0, 0)))
        sel = jnp.pad(sel, ((0, extra), (0, 0), (0, 0)))
        rhs = jnp.pad(rhs, ((0, extra), (0, 0), (0, 0)))

    kernel = _make_kernel(M, 1.0 / float(M * C_orig))

    # TODO(synk): for very long documents (esp. v7x with 64 MiB VMEM), add an
    # 'arbitrary' grid axis tiling Cpad with a VMEM scratch accumulator for the
    # coref sum, finalized via pl.when on the last C step.

    out = pl.pallas_call(
        kernel,
        out_shape=jax.ShapeDtypeStruct((bs_pad, 1, 128), jnp.float32),
        grid=(bs_pad // TB,),
        in_specs=[
            pl.BlockSpec((TB, 3, 2, Lmax), lambda b: (b, 0, 0, 0)),
            pl.BlockSpec((TB, twoM, QG), lambda b: (b, 0, 0)),
            pl.BlockSpec((TB, QG, Cpad), lambda b: (b, 0, 0)),
        ],
        out_specs=pl.BlockSpec((TB, 1, 128), lambda b: (b, 0, 0)),
        compiler_params=pltpu.CompilerParams(
            dimension_semantics=("parallel",),
            vmem_limit_bytes=int(budget),
        ),
    )(
        pack.astype(jnp.float32),
        sel.astype(jnp.bfloat16),    # 0/1 one-hot blocks, exact in bf16
        rhs.astype(jnp.bfloat16),    # bf16 HBM storage for the dominant tiles
    )
    return out[:bs, 0, :3]           # [cost_is_cluster, cost_is_mention, cost_coref]


# ----------------------------------------------------------------------------
# Glue: matcher stand-in + forward wrapper mirroring MatchingLoss.forward
# ----------------------------------------------------------------------------
class Args:
    add_junk = True
    reduction = 'mean'
    detr = False
    cluster_block = False
    multiclass_ce = False
    sum_attn = False
    b3_loss = False


def simple_matcher(outputs, targets):
    # TODO(synk): deterministic stand-in for the external Hungarian matcher module
    # injected via __init__; returns a fixed (distinct) permutation matching each
    # gold row to a query.
    bs, Q = outputs['coref_logits'].shape[0], outputs['coref_logits'].shape[1]
    G = targets['clusters'].shape[1]
    gold = jnp.tile(jnp.arange(G, dtype=jnp.int32)[None, :], (bs, 1))
    pred = (3 * gold + jnp.arange(bs, dtype=jnp.int32)[:, None]) % Q
    return pred, gold


def matching_loss_forward(outputs, targets, *, eos_coef, cost_is_cluster, cost_coref,
                          cost_is_mention, args):
    coref_logits = outputs['coref_logits']              # (bs, Q, doc_len) probabilities
    cluster_logits = outputs['cluster_logits'][..., 0]  # (bs, Q)   (== squeeze())
    mention_logits = outputs['mention_logits']          # (bs, doc_len)
    tclus = targets['clusters']                         # (bs, G, C_t) binary
    tmen = targets['mentions']                          # (bs, L_t)   binary
    bs, Q, _ = coref_logits.shape
    G, C_t = tclus.shape[1], tclus.shape[2]
    L_t = tmen.shape[1]

    pred_idx, gold_idx = simple_matcher(outputs, targets)            # (bs, M)
    M = pred_idx.shape[1]
    num_real = jnp.sum(jnp.sum(tclus, axis=-1) > 0, axis=-1)         # (bs,)
    real = (gold_idx < num_real[:, None]).astype(jnp.float32)        # (bs, M)

    # One-hot selectors for the in-kernel MXU gather.  one_hot() of an
    # out-of-range index is an all-zero row, so the kernel never reads OOB;
    # junk matches get an all-zero gold row (== torch's zero targets).
    pred_onehot = jax.nn.one_hot(pred_idx, Q, dtype=jnp.float32)                   # (bs, M, Q)
    gold_onehot = jax.nn.one_hot(gold_idx, G, dtype=jnp.float32) * real[..., None]  # (bs, M, G)

    # ---- cost_is_cluster inputs (mean's 1/Q folded into the weight) ----
    gold_is_cluster = jnp.clip(jnp.sum(pred_onehot * real[..., None], axis=1), 0.0, 1.0)
    weight_cluster = eos_coef + (1.0 - eos_coef) * gold_is_cluster

    # ---- cost_is_mention inputs (mean's 1/L folded into the weight) ----
    mention_slice = mention_logits[:, :L_t]      # mention_logits[:targets_mentions.shape[0]]
    weight_mention = tmen + eos_coef * (1.0 - tmen)
    inv_len = 1.0 / float(max(L_t, 1))
    # TODO(synk): if the real pipeline carries a non-trivial mention mask, fold
    # mask/sum(mask) into the weight here instead of 1/L.

    # ---- fused cluster+mention pack: (bs, 3, 2, Lmax), lane-padded, w=0 in padding ----
    Lmax = _round_up(max(Q, L_t, 1), 128)

    def pad_lane(x):
        return jnp.pad(x, ((0, 0), (0, Lmax - x.shape[-1])))

    p_rows = jnp.stack([pad_lane(cluster_logits), pad_lane(mention_slice)], axis=1)
    t_rows = jnp.stack([pad_lane(gold_is_cluster), pad_lane(tmen)], axis=1)
    w_rows = jnp.stack([pad_lane(weight_cluster * (1.0 / Q)),
                        pad_lane(weight_mention * inv_len)], axis=1)
    pack = jnp.stack([p_rows, t_rows, w_rows], axis=1)               # (bs, 3, 2, Lmax)

    # ---- block-diagonal selector + lane-padded rhs for the single MXU gather ----
    Cpad = _round_up(C_t, 128)
    coref_cols = jnp.pad(coref_logits[:, :, :C_t],                   # index_select cols 0..C_t-1
                         ((0, 0), (0, 0), (0, Cpad - C_t)))
    tclus_pad = jnp.pad(tclus, ((0, 0), (0, 0), (0, Cpad - C_t)))
    rhs = jnp.concatenate([coref_cols, tclus_pad], axis=1)           # (bs, Q+G, Cpad)
    sel_top = jnp.concatenate([pred_onehot, jnp.zeros((bs, M, G), jnp.float32)], axis=-1)
    sel_bot = jnp.concatenate([jnp.zeros((bs, M, Q), jnp.float32), gold_onehot], axis=-1)
    sel = jnp.concatenate([sel_top, sel_bot], axis=1)                # (bs, 2M, Q+G)

    parts = matching_loss_parts_pallas(pack, sel, rhs, M, C_t)
    loss_is_cluster = parts[:, 0]
    loss_is_mention = parts[:, 1]
    loss_coref = parts[:, 2]

    coref_w = (cost_coref + 2) if args.detr else cost_coref
    total = (coref_w * loss_coref + cost_is_cluster * loss_is_cluster
             + cost_is_mention * loss_is_mention)
    costs_parts = {
        'loss_is_cluster': cost_is_cluster * loss_is_cluster,
        'loss_is_mention': cost_is_mention * loss_is_mention,
        'loss_coref': coref_w * loss_coref,
    }
    return total, costs_parts


# ----------------------------------------------------------------------------
# Pure-JAX/NumPy reference (mirrors the PyTorch code for the active config path)
# ----------------------------------------------------------------------------
def reference_forward(outputs, targets, *, eos_coef, cost_is_cluster, cost_coref,
                      cost_is_mention, args):
    coref_all = np.asarray(outputs['coref_logits'])
    cluster_all = np.asarray(outputs['cluster_logits'])[..., 0]
    mention_all = np.asarray(outputs['mention_logits'])
    tclus = np.asarray(targets['clusters'])
    tmen = np.asarray(targets['mentions'])
    bs, Q, _ = coref_all.shape
    C_t = tclus.shape[2]
    L_t = tmen.shape[1]
    pred_idx, gold_idx = simple_matcher(outputs, targets)
    pred_idx, gold_idx = np.asarray(pred_idx), np.asarray(gold_idx)

    def bce(p, t, w):
        return -w * (t * np.maximum(np.log(p), -100.0)
                     + (1 - t) * np.maximum(np.log(1 - p), -100.0))

    totals = []
    for i in range(bs):
        num_real = int((tclus[i].sum(-1) > 0).sum())
        real = gold_idx[i] < num_real
        pred_real, gold_real = pred_idx[i][real], gold_idx[i][real]
        pred_junk = pred_idx[i][~real]
        gold_is_cluster = np.zeros((Q,), np.float32)
        weight_cluster = eos_coef * np.ones((Q,), np.float32)
        gold_is_cluster[pred_real] = 1.0
        weight_cluster[pred_real] = 1.0
        c_cluster = bce(cluster_all[i], gold_is_cluster, weight_cluster).mean()

        men = mention_all[i][:L_t]
        wm = tmen[i] + eos_coef * (1 - tmen[i])
        c_mention = bce(men, tmen[i], wm).mean()

        cor = coref_all[i][:, :C_t]
        perm_p = np.concatenate([cor[pred_real], cor[pred_junk]], 0)
        perm_t = np.concatenate(
            [tclus[i][gold_real], np.zeros((len(pred_junk), C_t), np.float32)], 0)
        c_coref = bce(perm_p, perm_t, 1.0).mean()

        w_coref = (cost_coref + 2) if args.detr else cost_coref
        totals.append(w_coref * c_coref + cost_is_cluster * c_cluster
                      + cost_is_mention * c_mention)
    return np.stack(totals)


# ----------------------------------------------------------------------------
if __name__ == "__main__":
    key = jax.random.PRNGKey(0)
    bs, Q, doc_len = 2, 8, 32
    G, C_t, L_t = 8, 32, 32
    k1, k2, k3, k4, k5 = jax.random.split(key, 5)

    coref = jax.nn.sigmoid(jax.random.normal(k1, (bs, Q, doc_len), jnp.float32))
    # The kernel stores the (Q, doc_len) coref tile as bf16 in HBM; round the
    # example probabilities once so the f32 reference sees exactly the values
    # the kernel computes with (all other tensors are binary / exact).
    # TODO(synk): if bit-faithful loss values are required in production, keep
    # coref in f32 (or pass logits and use a log-sigmoid BCE in-kernel).
    coref = coref.astype(jnp.bfloat16).astype(jnp.float32)

    outputs = {
        'coref_logits': coref,
        'cluster_logits': jax.nn.sigmoid(jax.random.normal(k2, (bs, Q, 1), jnp.float32)),
        'mention_logits': jax.nn.sigmoid(jax.random.normal(k3, (bs, doc_len), jnp.float32)),
    }

    # targets: first `num_real[i]` cluster rows are real (non-empty), the rest are padding
    num_real = np.array([5, 6])
    clus = (jax.random.uniform(k4, (bs, G, C_t)) < 0.3).astype(jnp.float32)
    clus = jnp.maximum(clus, jnp.eye(G, C_t, dtype=jnp.float32)[None])   # real rows non-empty
    real_row_mask = (np.arange(G)[None, :] < num_real[:, None]).astype(np.float32)
    clus = clus * jnp.asarray(real_row_mask)[:, :, None]
    targets = {
        'clusters': clus,
        'mentions': (jax.random.uniform(k5, (bs, L_t)) < 0.5).astype(jnp.float32),
    }

    args = Args()
    total, parts = matching_loss_forward(
        outputs, targets, eos_coef=0.1, cost_is_cluster=1.0,
        cost_coref=1.0, cost_is_mention=1.0, args=args)
    total = jax.block_until_ready(total)

    ref_total = reference_forward(
        outputs, targets, eos_coef=0.1, cost_is_cluster=1.0,
        cost_coref=1.0, cost_is_mention=1.0, args=args)
    np.testing.assert_allclose(np.asarray(total), ref_total, rtol=1e-5, atol=1e-5)

    print("KERNEL_OK")
</pallas_src>

<mosaic_0001>
module attributes {stable_mosaic.version = 11 : i64} {
  func.func @kernel(%arg0: i32, %arg1: memref<2x3x2x128xf32, #tpu.memory_space<vmem>>, %arg2: memref<2x16x16xbf16, #tpu.memory_space<vmem>>, %arg3: memref<2x16x128xbf16, #tpu.memory_space<vmem>>, %arg4: memref<2x1x128xf32, #tpu.memory_space<vmem>>) attributes {dimension_semantics = [#tpu.dimension_semantics<parallel>], iteration_bounds = array<i64: 1>, scalar_prefetch = 0 : i64, scratch_operands = 0 : i64, tpu.core_type = #tpu.core_type<tc>, window_params = [{transform_indices = @transform_0, window_bounds = array<i64: 2, 3, 2, 128>}, {transform_indices = @transform_1, window_bounds = array<i64: 2, 16, 16>}, {transform_indices = @transform_2, window_bounds = array<i64: 2, 16, 128>}, {transform_indices = @transform_3, window_bounds = array<i64: 2, 1, 128>}]} {
    %c0 = arith.constant 0 : index
    %c0_0 = arith.constant 0 : index
    %c0_1 = arith.constant 0 : index
    %c0_2 = arith.constant 0 : index
    %0 = vector.load %arg1[%c0, %c0_0, %c0_1, %c0_2] : memref<2x3x2x128xf32, #tpu.memory_space<vmem>>, vector<2x3x2x128xf32>
    %1 = vector.extract_strided_slice %0 {offsets = [0, 0, 0, 0], sizes = [2, 1, 2, 128], strides = [1, 1, 1, 1]} : vector<2x3x2x128xf32> to vector<2x1x2x128xf32>
    %2 = vector.shape_cast %1 : vector<2x1x2x128xf32> to vector<2x2x128xf32>
    %3 = vector.extract_strided_slice %0 {offsets = [0, 1, 0, 0], sizes = [2, 1, 2, 128], strides = [1, 1, 1, 1]} : vector<2x3x2x128xf32> to vector<2x1x2x128xf32>
    %4 = vector.shape_cast %3 : vector<2x1x2x128xf32> to vector<2x2x128xf32>
    %5 = vector.extract_strided_slice %0 {offsets = [0, 2, 0, 0], sizes = [2, 1, 2, 128], strides = [1, 1, 1, 1]} : vector<2x3x2x128xf32> to vector<2x1x2x128xf32>
    %6 = vector.shape_cast %5 : vector<2x1x2x128xf32> to vector<2x2x128xf32>
    %cst = arith.constant 5.000000e-01 : f32
    %7 = vector.broadcast %cst : f32 to vector<2x2x128xf32>
    %8 = arith.cmpf oge, %4, %7 : vector<2x2x128xf32>
    %cst_3 = arith.constant 1.000000e+00 : f32
    %9 = vector.broadcast %cst_3 : f32 to vector<2x2x128xf32>
    %10 = arith.subf %9, %2 : vector<2x2x128xf32>
    %11 = arith.select %8, %2, %10 : vector<2x2x128xi1>, vector<2x2x128xf32>
    %cst_4 = arith.constant 0.000000e+00 : f32
    %12 = vector.broadcast %cst_4 : f32 to vector<2x2x128xf32>
    %13 = arith.subf %12, %6 : vector<2x2x128xf32>
    %14 = math.log %11 : vector<2x2x128xf32>
    %cst_5 = arith.constant -1.000000e+02 : f32
    %15 = vector.broadcast %cst_5 : f32 to vector<2x2x128xf32>
    %16 = arith.maximumf %14, %15 : vector<2x2x128xf32>
    %17 = arith.mulf %13, %16 : vector<2x2x128xf32>
    %cst_6 = arith.constant dense<0.000000e+00> : vector<2x2xf32>
    %18 = vector.multi_reduction <add>, %17, %cst_6 [2] : vector<2x2x128xf32> to vector<2x2xf32>
    %19 = vector.shape_cast %18 : vector<2x2xf32> to vector<2x2x1xf32>
    %20 = vector.extract_strided_slice %19 {offsets = [0, 0, 0], sizes = [2, 1, 1], strides = [1, 1, 1]} : vector<2x2x1xf32> to vector<2x1x1xf32>
    %21 = vector.extract_strided_slice %19 {offsets = [0, 1, 0], sizes = [2, 1, 1], strides = [1, 1, 1]} : vector<2x2x1xf32> to vector<2x1x1xf32>
    %c0_7 = arith.constant 0 : index
    %c0_8 = arith.constant 0 : index
    %c0_9 = arith.constant 0 : index
    %22 = vector.load %arg2[%c0_7, %c0_8, %c0_9] : memref<2x16x16xbf16, #tpu.memory_space<vmem>>, vector<2x16x16xbf16>
    %c0_10 = arith.constant 0 : index
    %c0_11 = arith.constant 0 : index
    %c0_12 = arith.constant 0 : index
    %23 = vector.load %arg3[%c0_10, %c0_11, %c0_12] : memref<2x16x128xbf16, #tpu.memory_space<vmem>>, vector<2x16x128xbf16>
    "tpu.trace_start"() <{level = 10 : i32, message = "bmk,bkc->bmc"}> : () -> ()
    %cst_13 = arith.constant dense<0.000000e+00> : vector<2x16x128xf32>
    %24 = tpu.matmul %22, %23, %cst_13 {dimension_numbers = #tpu.dot_dimension_numbers<[2], [1], [1], [2], [0, 0, 0, 1, 1, 2], [0], [0]>} : vector<2x16x16xbf16>, vector<2x16x128xbf16>, vector<2x16x128xf32> -> vector<2x16x128xf32>
    "tpu.trace_stop"() : () -> ()
    %25 = vector.extract_strided_slice %24 {offsets = [0, 0, 0], sizes = [2, 8, 128], strides = [1, 1, 1]} : vector<2x16x128xf32> to vector<2x8x128xf32>
    %26 = vector.extract_strided_slice %24 {offsets = [0, 8, 0], sizes = [2, 8, 128], strides = [1, 1, 1]} : vector<2x16x128xf32> to vector<2x8x128xf32>
    %cst_14 = arith.constant 5.000000e-01 : f32
    %27 = vector.broadcast %cst_14 : f32 to vector<2x8x128xf32>
    %28 = arith.cmpf oge, %26, %27 : vector<2x8x128xf32>
    %cst_15 = arith.constant 1.000000e+00 : f32
    %29 = vector.broadcast %cst_15 : f32 to vector<2x8x128xf32>
    %30 = arith.subf %29, %25 : vector<2x8x128xf32>
    %31 = arith.select %28, %25, %30 : vector<2x8x128xi1>, vector<2x8x128xf32>
    %32 = math.log %31 : vector<2x8x128xf32>
    %cst_16 = arith.constant -1.000000e+02 : f32
    %33 = vector.broadcast %cst_16 : f32 to vector<2x8x128xf32>
    %34 = arith.maximumf %32, %33 : vector<2x8x128xf32>
    %cst_17 = arith.constant -3.906250e-03 : f32
    %35 = vector.broadcast %cst_17 : f32 to vector<2x8x128xf32>
    %36 = arith.mulf %35, %34 : vector<2x8x128xf32>
    %cst_18 = arith.constant dense<0.000000e+00> : vector<2x8xf32>
    %37 = vector.multi_reduction <add>, %36, %cst_18 [2] : vector<2x8x128xf32> to vector<2x8xf32>
    %38 = vector.shape_cast %37 : vector<2x8xf32> to vector<2x8x1xf32>
    %cst_19 = arith.constant dense<0.000000e+00> : vector<2x1xf32>
    %39 = vector.multi_reduction <add>, %38, %cst_19 [1] : vector<2x8x1xf32> to vector<2x1xf32>
    %40 = vector.shape_cast %39 : vector<2x1xf32> to vector<2x1x1xf32>
    %41 = tpu.iota {dimensions = array<i32: 2>} : vector<2x1x128xi32>
    %c0_i32 = arith.constant 0 : i32
    %42 = vector.broadcast %c0_i32 : i32 to vector<2x1x128xi32>
    %43 = arith.cmpi eq, %41, %42 : vector<2x1x128xi32>
    %c1_i32 = arith.constant 1 : i32
    %44 = vector.broadcast %c1_i32 : i32 to vector<2x1x128xi32>
    %45 = arith.cmpi eq, %41, %44 : vector<2x1x128xi32>
    %c2_i32 = arith.constant 2 : i32
    %46 = vector.broadcast %c2_i32 : i32 to vector<2x1x128xi32>
    %47 = arith.cmpi eq, %41, %46 : vector<2x1x128xi32>
    %cst_20 = arith.constant 0.000000e+00 : f32
    %48 = vector.shape_cast %40 : vector<2x1x1xf32> to vector<2x1x1xf32>
    %49 = vector.broadcast %48 : vector<2x1x1xf32> to vector<2x1x128xf32>
    %50 = vector.broadcast %cst_20 : f32 to vector<2x1x128xf32>
    %51 = arith.select %47, %49, %50 : vector<2x1x128xi1>, vector<2x1x128xf32>
    %52 = vector.shape_cast %21 : vector<2x1x1xf32> to vector<2x1x1xf32>
    %53 = vector.broadcast %52 : vector<2x1x1xf32> to vector<2x1x128xf32>
    %54 = arith.select %45, %53, %51 : vector<2x1x128xi1>, vector<2x1x128xf32>
    %55 = vector.shape_cast %20 : vector<2x1x1xf32> to vector<2x1x1xf32>
    %56 = vector.broadcast %55 : vector<2x1x1xf32> to vector<2x1x128xf32>
    %57 = arith.select %43, %56, %54 : vector<2x1x128xi1>, vector<2x1x128xf32>
    %c0_21 = arith.constant 0 : index
    %c0_22 = arith.constant 0 : index
    %c0_23 = arith.constant 0 : index
    %58 = vector.load %arg4[%c0_21, %c0_22, %c0_23] : memref<2x1x128xf32, #tpu.memory_space<vmem>>, vector<2x1x128xf32>
    tpu.vector_store %arg4[%c0_21, %c0_22, %c0_23], %57 {strides = array<i32>} : memref<2x1x128xf32, #tpu.memory_space<vmem>>, vector<2x1x128xf32>,
    return
  }
  func.func @transform_0(%arg0: i32) -> (i32, i32, i32, i32) {
    %c0_i32 = arith.constant 0 : i32
    %c0_i32_0 = arith.constant 0 : i32
    %c0_i32_1 = arith.constant 0 : i32
    %c0_i32_2 = arith.constant 0 : i32
    return %arg0, %c0_i32, %c0_i32_0, %c0_i32_1 : i32, i32, i32, i32
  }
  func.func @transform_1(%arg0: i32) -> (i32, i32, i32) {
    %c0_i32 = arith.constant 0 : i32
    %c0_i32_0 = arith.constant 0 : i32
    %c0_i32_1 = arith.constant 0 : i32
    return %arg0, %c0_i32, %c0_i32_0 : i32, i32, i32
  }
  func.func @transform_2(%arg0: i32) -> (i32, i32, i32) {
    %c0_i32 = arith.constant 0 : i32
    %c0_i32_0 = arith.constant 0 : i32
    %c0_i32_1 = arith.constant 0 : i32
    return %arg0, %c0_i32, %c0_i32_0 : i32, i32, i32
  }
  func.func @transform_3(%arg0: i32) -> (i32, i32, i32) {
    %c0_i32 = arith.constant 0 : i32
    %c0_i32_0 = arith.constant 0 : i32
    %c0_i32_1 = arith.constant 0 : i32
    return %arg0, %c0_i32, %c0_i32_0 : i32, i32, i32
  }
}

</mosaic_0001>

<llo_original>
// kernel: tpu_custom_call.1
$region0: #{tpu_custom_call.1}
  #allocation0 [shape = 'u32[]', space=smem, size = 0x4, offset = 0x4, fixed_abs, tag = 'smem constant byte address 0x4 - core index']
  #allocation1 [shape = 'u32[144,128]{1,0:T(1,128)}', space=vmem, size = 0x12000, scoped, tag = 'internal scratch']
  %s0 = inlined_call_operand.hbm [shape: f32[2,3,2,128], index: 0, kind: input, shape index: {}]
  %s1 = inlined_call_operand.hbm [shape: bf16[2,16,16], index: 1, kind: input, shape index: {}]
  %s2 = inlined_call_operand.hbm [shape: bf16[2,16,128], index: 2, kind: input, shape index: {}]
  %s3 = inlined_call_operand.hbm [shape: f32[2,1,128], index: 3, kind: output, shape index: {}]
  %s4 = sld [smem:[#allocation0]]
  $region34: #{tpu_custom_call.1} parent=0
    _
  %s6 = ssub.s32 1, %s4
  %s7 = scalar_select 0, %s6, %s4
  $region1: #{tpu_custom_call.1} parent=0
    #allocation2 [shape = 'u8[6144]{0}', space=vmem, size = 0x1800, scoped, tag = 'input window, operand 0, single buffered']
    #allocation3 [shape = 's32[1]{0}', space=sflag, size = 0x4, scoped, tag = 'scoped memory for tpu_custom_call.1']
    #allocation4 [shape = 's32[1]{0}', space=sflag, size = 0x4, scoped, tag = 'scoped memory for tpu_custom_call.1']
    #allocation5 [shape = 'u8[8192]{0}', space=vmem, size = 0x2000, scoped, tag = 'input window, operand 1, single buffered']
    #allocation6 [shape = 's32[1]{0}', space=sflag, size = 0x4, scoped, tag = 'scoped memory for tpu_custom_call.1']
    #allocation7 [shape = 'u8[8192]{0}', space=vmem, size = 0x2000, scoped, tag = 'input window, operand 2, single buffered']
    #allocation8 [shape = 'u8[1024]{0}', space=vmem, size = 0x400, scoped, tag = 'output window, operand 0, single buffered']
    %8 = vsyncpa [#allocation3], 0
    %9 = vsyncpa [#allocation6], 0
    %10 = vsyncpa [#allocation4], 0
    // Predicated region
    $region2: #{tpu_custom_call.1} parent=1 // pred_check
      _
    $region3: #{tpu_custom_call.1} parent=1 // pred_check_branch
      %12 = sbr.rel (0) target = $region5
    $region4: #{tpu_custom_call.1} parent=1 // pred_region
      %s14 = ssub.s32 192, 192
      %15 = vsyncadd [#allocation3], %s14
      %s16 = sshll.u32 [#allocation2], 4
      %s17 = int_to_ptr.vmem [resolvable:$true] %s16
      %22 = dma.hbm_to_vmem [thread:$0]  %s0, 192, %s17, [#allocation3], 32, 32, 2
    $region5: #{tpu_custom_call.1} parent=1 // pred_fallthru
      _
    // Predicated region
    $region6: #{tpu_custom_call.1} parent=1 // pred_check
      _
    $region7: #{tpu_custom_call.1} parent=1 // pred_check_branch
      %24 = sbr.rel (0) target = $region9
    $region8: #{tpu_custom_call.1} parent=1 // pred_region
      %s26 = ssub.s32 256, 256
      %27 = vsyncadd [#allocation6], %s26
      %s28 = sshll.u32 [#allocation5], 4
      %s29 = int_to_ptr.vmem [resolvable:$true] %s28
      %34 = dma.hbm_to_vmem [thread:$0]  %s1, 256, %s29, [#allocation6], 64, 64, 4
    $region9: #{tpu_custom_call.1} parent=1 // pred_fallthru
      _
    // Predicated region
    $region10: #{tpu_custom_call.1} parent=1 // pred_check
      _
    $region11: #{tpu_custom_call.1} parent=1 // pred_check_branch
      %36 = sbr.rel (0) target = $region13
    $region12: #{tpu_custom_call.1} parent=1 // pred_region
      %s38 = ssub.s32 256, 256
      %39 = vsyncadd [#allocation6], %s38
      %s40 = sshll.u32 [#allocation7], 4
      %s41 = int_to_ptr.vmem [resolvable:$true] %s40
      %46 = dma.hbm_to_vmem [thread:$0]  %s2, 256, %s41, [#allocation6], 64, 64, 4
    $region13: #{tpu_custom_call.1} parent=1 // pred_fallthru
      _
    // Predicated region
    $region14: #{tpu_custom_call.1} parent=1 // pred_check
      _
    $region15: #{tpu_custom_call.1} parent=1 // pred_check_branch
      %48 = sbr.rel (0) target = $region17
    $region16: #{tpu_custom_call.1} parent=1 // pred_region
      %49 = dma.done [#allocation3], 192
    $region17: #{tpu_custom_call.1} parent=1 // pred_fallthru
      _
    // Predicated region
    $region18: #{tpu_custom_call.1} parent=1 // pred_check
      _
    $region19: #{tpu_custom_call.1} parent=1 // pred_check_branch
      %51 = sbr.rel (0) target = $region21
    $region20: #{tpu_custom_call.1} parent=1 // pred_region
      %52 = dma.done [#allocation6], 256
    $region21: #{tpu_custom_call.1} parent=1 // pred_fallthru
      _
    // Predicated region
    $region22: #{tpu_custom_call.1} parent=1 // pred_check
      _
    $region23: #{tpu_custom_call.1} parent=1 // pred_check_branch
      %54 = sbr.rel (0) target = $region25
    $region24: #{tpu_custom_call.1} parent=1 // pred_region
      %55 = dma.done [#allocation6], 256
    $region25: #{tpu_custom_call.1} parent=1 // pred_fallthru
      _
    %v57 = vld [vmem:[#allocation2] sm:$0x3]
    %v58 = vld [vmem:[#allocation2 + $0x2] sm:$0x3]
    %v59 = vld [vmem:[#allocation2 + $0x4] sm:$0x3]
    %v60 = vld [vmem:[#allocation2 + $0x6] sm:$0x3]
    %v61 = vld [vmem:[#allocation2 + $0x8] sm:$0x3]
    %v62 = vld [vmem:[#allocation2 + $0xa] sm:$0x3]
    %vm63 = vcmp.ge.f32.partialorder %v58, 0.5
    %vm64 = vcmp.ge.f32.partialorder %v61, 0.5
    %v65 = vsub.f32 1.0, %v57
    %v66 = vsub.f32 1.0, %v60
    %v67 = vsel %vm63, %v57, %v65
    %v68 = vsel %vm64, %v60, %v66
    %v69 = vsub.f32 0.0, %v59
    %v70 = vsub.f32 0.0, %v62
    %v71 = vlog2.pop %v67
    %v72 = vmul.f32 %v71, 0.6931472
    %v73 = vlog2.pop %v68
    %v74 = vmul.f32 %v73, 0.6931472
    %v75 = vmax.f32 %v72, -100.0
    %v76 = vmax.f32 %v74, -100.0
    %v77 = vmul.f32 %v69, %v75
    %v78 = vmul.f32 %v70, %v76
    %vm79 = vcmask 1041408
    %v80 = vsel %vm79, %v77, 0.0
    %81 = vadd.xlane.f32.xlu0 %v80
    %v82 = vpop.xlane.xlu0 %81
    %v83 = vsel %vm79, %v78, 0.0
    %84 = vadd.xlane.f32.xlu0 %v83
    %v85 = vpop.xlane.xlu0 %84
    %v86 = vld [vmem:[#allocation5] sm:$0xf]
    %v87 = vld [vmem:[#allocation5 + $0x4] sm:$0xf]
    %v88 = vld [vmem:[#allocation5 + $0x8] sm:$0xf]
    %v89 = vld [vmem:[#allocation5 + $0xc] sm:$0xf]
    %v90 = vld [vmem:[#allocation7] sm:$0xf]
    %v91 = vld [vmem:[#allocation7 + $0x4] sm:$0xf]
    %v92 = vld [vmem:[#allocation7 + $0x8] sm:$0xf]
    %v93 = vld [vmem:[#allocation7 + $0xc] sm:$0xf]
    %v96 = vunpack.c.l.b16 %v86
    %v97 = vunpack.c.l.b16 %v87
    %v98 = vpack.c.b16 %v97, %v96
    %v101 = vunpack.c.l.b16 %v90
    %v102 = vunpack.c.l.b16 %v91
    %v103 = vpack.c.b16 %v102, %v101
    %vm105 = vcmask 130048
    %v107 = vsel %vm105, %v98, 0
    %109 = vmatprep.subr.bf16.mxu0 0
    %110 = vmatpush1.bf16.msra.mxu0 %v103
    %111 = vmatprep.subr.bf16.mxu0 0
    %112 = vmatpush1.bf16.msra.mxu0 0
    %113 = vmatprep.subr.bf16.mxu0 0
    %114 = vmatpush1.bf16.msra.mxu0 0
    %115 = vmatprep.subr.bf16.mxu0 0
    %116 = vmatpush1.bf16.msra.mxu0 0
    %117 = vmatprep.subr.bf16.mxu0 0
    %118 = vmatpush1.bf16.msra.mxu0 0
    %119 = vmatprep.subr.bf16.mxu0 0
    %120 = vmatpush1.bf16.msra.mxu0 0
    %121 = vmatprep.subr.bf16.mxu0 0
    %122 = vmatpush1.bf16.msra.mxu0 0
    %123 = vmatprep.subr.bf16.mxu0 0
    %124 = vmatpush1.bf16.msra.mxu0 0
    %125 = vmatprep.subr.bf16.mxu0 0
    %126 = vmatpush1.bf16.msra.mxu0 0
    %127 = vmatprep.subr.bf16.mxu0 0
    %128 = vmatpush1.bf16.msra.mxu0 0
    %129 = vmatprep.subr.bf16.mxu0 0
    %130 = vmatpush1.bf16.msra.mxu0 0
    %131 = vmatprep.subr.bf16.mxu0 0
    %132 = vmatpush1.bf16.msra.mxu0 0
    %133 = vmatprep.subr.bf16.mxu0 0
    %134 = vmatpush1.bf16.msra.mxu0 0
    %135 = vmatprep.subr.bf16.mxu0 0
    %136 = vmatpush1.bf16.msra.mxu0 0
    %137 = vmatprep.subr.bf16.mxu0 0
    %138 = vmatpush1.bf16.msra.mxu0 0
    %139 = vmatprep.subr.bf16.mxu0 0
    %140 = vmatpush1.bf16.msra.mxu0 0
    %141 = vmatprep.mubr.bf16.mxu0 0
    %142 = vmatmul.mubr.bf16.gmra.mrb[0].mxu0 %v107
    %v143 = vpop.f32.mrb[0].mxu0
    %v144 = vadd.f32 0.0, %v143
    %v145 = vpop.f32.mrb[0].mxu0
    %v146 = vpop.f32.mrb[0].mxu0
    %v147 = vadd.f32 0.0, %v146
    %v148 = vpop.f32.mrb[0].mxu0
    %149 = vdwg.mxu0
    %v152 = vunpack.c.l.b16 %v88
    %v153 = vunpack.c.l.b16 %v89
    %v154 = vpack.c.b16 %v153, %v152
    %v157 = vunpack.c.l.b16 %v92
    %v158 = vunpack.c.l.b16 %v93
    %v159 = vpack.c.b16 %v158, %v157
    %v162 = vsel %vm105, %v154, 0
    %164 = vmatprep.subr.bf16.mxu0 0
    %165 = vmatpush1.bf16.msra.mxu0 %v159
    %166 = vmatprep.subr.bf16.mxu0 0
    %167 = vmatpush1.bf16.msra.mxu0 0
    %168 = vmatprep.subr.bf16.mxu0 0
    %169 = vmatpush1.bf16.msra.mxu0 0
    %170 = vmatprep.subr.bf16.mxu0 0
    %171 = vmatpush1.bf16.msra.mxu0 0
    %172 = vmatprep.subr.bf16.mxu0 0
    %173 = vmatpush1.bf16.msra.mxu0 0
    %174 = vmatprep.subr.bf16.mxu0 0
    %175 = vmatpush1.bf16.msra.mxu0 0
    %176 = vmatprep.subr.bf16.mxu0 0
    %177 = vmatpush1.bf16.msra.mxu0 0
    %178 = vmatprep.subr.bf16.mxu0 0
    %179 = vmatpush1.bf16.msra.mxu0 0
    %180 = vmatprep.subr.bf16.mxu0 0
    %181 = vmatpush1.bf16.msra.mxu0 0
    %182 = vmatprep.subr.bf16.mxu0 0
    %183 = vmatpush1.bf16.msra.mxu0 0
    %184 = vmatprep.subr.bf16.mxu0 0
    %185 = vmatpush1.bf16.msra.mxu0 0
    %186 = vmatprep.subr.bf16.mxu0 0
    %187 = vmatpush1.bf16.msra.mxu0 0
    %188 = vmatprep.subr.bf16.mxu0 0
    %189 = vmatpush1.bf16.msra.mxu0 0
    %190 = vmatprep.subr.bf16.mxu0 0
    %191 = vmatpush1.bf16.msra.mxu0 0
    %192 = vmatprep.subr.bf16.mxu0 0
    %193 = vmatpush1.bf16.msra.mxu0 0
    %194 = vmatprep.subr.bf16.mxu0 0
    %195 = vmatpush1.bf16.msra.mxu0 0
    %196 = vmatprep.mubr.bf16.mxu0 0
    %197 = vmatmul.mubr.bf16.gmra.mrb[0].mxu0 %v162
    %v198 = vpop.f32.mrb[0].mxu0
    %v199 = vadd.f32 0.0, %v198
    %v200 = vpop.f32.mrb[0].mxu0
    %v201 = vpop.f32.mrb[0].mxu0
    %v202 = vadd.f32 0.0, %v201
    %v203 = vpop.f32.mrb[0].mxu0
    %204 = vdwg.mxu0
    %vm205 = vcmp.ge.f32.partialorder %v147, 0.5
    %vm206 = vcmp.ge.f32.partialorder %v202, 0.5
    %v207 = vsub.f32 1.0, %v144
    %v208 = vsub.f32 1.0, %v199
    %v209 = vsel %vm205, %v144, %v207
    %v210 = vsel %vm206, %v199, %v208
    %v211 = vlog2.pop %v209
    %v212 = vmul.f32 %v211, 0.6931472
    %v213 = vlog2.pop %v210
    %v214 = vmul.f32 %v213, 0.6931472
    %v215 = vmax.f32 %v212, -100.0
    %v216 = vmax.f32 %v214, -100.0
    %v217 = vmul.f32 %v215, -0.00390625
    %v218 = vmul.f32 %v216, -0.00390625
    %219 = vadd.xlane.f32.xlu0 %v217
    %v220 = vpop.xlane.xlu0 %219
    %221 = vadd.xlane.f32.xlu0 %v218
    %v222 = vpop.xlane.xlu0 %221
    %v223 = vrot.slane %v220, 4
    %v224 = vadd.f32 %v220, %v223
    %v225 = vrot.slane %v224, 2
    %v226 = vadd.f32 %v224, %v225
    %v227 = vrot.slane %v226, 1
    %v228 = vadd.f32 %v226, %v227
    %v229 = vrot.slane %v222, 4
    %v230 = vadd.f32 %v222, %v229
    %v231 = vrot.slane %v230, 2
    %v232 = vadd.f32 %v230, %v231
    %v233 = vrot.slane %v232, 1
    %v234 = vadd.f32 %v232, %v233
    %v235 = vlaneseq
    %v236 = vand.u32 %v235, 127
    %vm237 = vcmp.eq.s32.totalorder %v236, 0
    %vm238 = vcmp.eq.s32.totalorder %v236, 1
    %vm239 = vcmp.eq.s32.totalorder %v236, 2
    %v240 = vsel %vm239, %v228, 0.0
    %v241 = vsel %vm239, %v234, 0.0
    %v242 = vsel %vm238, %v82, %v240
    %v243 = vsel %vm238, %v85, %v241
    %v246 = vrot.slane %v242, 1
    %v247 = vrot.slane %v243, 1
    %v250 = vsel %vm237, %v82, %v246
    %v251 = vsel %vm237, %v85, %v247
    %252 = vst [vmem:[#allocation8] sm:$0x1] %v250
    %253 = vst [vmem:[#allocation8 + $0x1] sm:$0x1] %v251
    // Predicated region
    $region26: #{tpu_custom_call.1} parent=1 // pred_check
      _
    $region27: #{tpu_custom_call.1} parent=1 // pred_check_branch
      %255 = sbr.rel (0) target = $region29
    $region28: #{tpu_custom_call.1} parent=1 // pred_region
      %s257 = ssub.s32 32, 32
      %258 = vsyncadd [#allocation4], %s257
      %s259 = sshll.u32 [#allocation8], 4
      %s260 = int_to_ptr.vmem [resolvable:$true] %s259
      %265 = dma.vmem_to_hbm [thread:$0]  %s260, 32, %s3, [#allocation4], 16, 16, 1
    $region29: #{tpu_custom_call.1} parent=1 // pred_fallthru
      _
    // Predicated region
    $region30: #{tpu_custom_call.1} parent=1 // pred_check
      _
    $region31: #{tpu_custom_call.1} parent=1 // pred_check_branch
      %267 = sbr.rel (0) target = $region33
    $region32: #{tpu_custom_call.1} parent=1 // pred_region
      %268 = dma.done [#allocation4], 32
    $region33: #{tpu_custom_call.1} parent=1 // pred_fallthru
      _
    %269 = vsyncpa [#allocation3], 1
    %270 = vsyncpa [#allocation6], 1
    %271 = vsyncpa [#allocation4], 1

</llo_original>
